<compile_context>
chip_gen: v6e
topology: v6e:2x2x1
jax: 0.10.0
libtpu: 0.0.40
codegen_flags: <defaults>
</compile_context>

<pallas_src>
import math

import jax
import jax.numpy as jnp
from jax import lax
from jax.experimental import pallas as pl
from jax.experimental.pallas import tpu as pltpu

_LANES = 128
_TILE_BYTES = 2 << 20        # per-input, per-pipeline-buffer VMEM budget
_MAX_CHUNK_ROWS = 512        # in-kernel accumulation chunk (bounds live vregs)


def _round_up(x, m):
    return ((x + m - 1) // m) * m


def _sublane_multiple(dtype):
    # native second-minor tile: f32 -> 8, bf16 -> 16, int8/fp8 -> 32
    return max(8, 32 // jnp.dtype(dtype).itemsize)


def _num_core_split():
    # v7x has 2 TensorCores per chip; v5e/v6e have 1, where a split only adds
    # grid steps and a wasted overhang tile.
    # TODO(synk): on v7x, verify plain "parallel" really shards this axis across
    # both TensorCores; if the profile shows serialization, switch to
    # pltpu.CORE_PARALLEL (or pl.core_map + pltpu.create_tensorcore_mesh).
    try:
        kind = jax.devices()[0].device_kind.lower()
    except Exception:
        return 1
    return 2 if "v7" in kind else 1


def _make_focal_kernel(rows_total, tile_rows, chunk_rows, tiles_per_core):
    n_chunks = tile_rows // chunk_rows
    chunk_sub = chunk_rows // 8

    def kernel(pred_ref, gt_ref, loss_ref, npos_ref):
        c = pl.program_id(0)     # core-split ("parallel") axis
        i = pl.program_id(1)     # reduction ("arbitrary") axis

        @pl.when(i == 0)
        def _init():
            loss_ref[...] = jnp.zeros_like(loss_ref)
            npos_ref[...] = jnp.zeros_like(npos_ref)

        # Row-granular bookkeeping (int32 is safe for < 2^31 rows).
        tile_row0 = (c * tiles_per_core + i) * tile_rows
        rem_rows = rows_total - tile_row0

        def _reduce8(x):
            # (chunk_rows, 128) -> (8, 128): pure VALU vreg adds (no XLU).
            return jnp.sum(x.reshape(chunk_sub, 8, _LANES), axis=0)

        def _accumulate(r0, valid):
            p = pred_ref[pl.ds(r0, chunk_rows), :].astype(jnp.float32)
            g = gt_ref[pl.ds(r0, chunk_rows), :].astype(jnp.float32)

            pos_mask = g == 1.0
            one_m_p = 1.0 - p
            one_m_g = 1.0 - g
            sq = one_m_g * one_m_g
            # Merged pos/neg weight (pos term is identically 0 when no pos).
            w = jnp.where(pos_mask, one_m_p * one_m_p, (p * p) * (sq * sq))
            # Single transcendental per element: log(p) on pos, log(1-p) else.
            logx = jnp.log(jnp.where(pos_mask, p, one_m_p))
            keep = jnp.logical_or(pos_mask, g < 1.0)   # gt > 1 contributes 0
            if valid is not None:
                keep = jnp.logical_and(keep, valid)
                pos_mask = jnp.logical_and(pos_mask, valid)
            # where(mask, term, 0) instead of term*mask: no -inf*0 / NaN leaks.
            contrib = jnp.where(keep, logx * w, 0.0)

            loss_ref[...] += _reduce8(contrib)
            npos_ref[...] += _reduce8(pos_mask.astype(jnp.float32))

        def _full_chunk(j, carry):
            _accumulate(pl.multiple_of(j * chunk_rows, chunk_rows), None)
            return carry

        def _masked_chunk(j, carry):
            r0 = pl.multiple_of(j * chunk_rows, chunk_rows)
            row_ids = lax.broadcasted_iota(jnp.int32, (chunk_rows, _LANES), 0)
            _accumulate(r0, (r0 + row_ids) < rem_rows)
            return carry

        @pl.when(rem_rows >= tile_rows)
        def _full_tile():                     # fast path: no per-element masks
            if n_chunks == 1:
                _accumulate(0, None)
            else:
                lax.fori_loop(0, n_chunks, _full_chunk, 0)

        @pl.when(jnp.logical_and(rem_rows > 0, rem_rows < tile_rows))
        def _partial_tile():                  # ragged last tile only
            if n_chunks == 1:
                row_ids = lax.broadcasted_iota(
                    jnp.int32, (chunk_rows, _LANES), 0)
                _accumulate(0, row_ids < rem_rows)
            else:
                # Only loop over chunks that contain at least one valid row.
                n_valid = (rem_rows + chunk_rows - 1) // chunk_rows
                lax.fori_loop(0, n_valid, _masked_chunk, 0)

        # rem_rows <= 0 (core-split overhang tile): no compute at all.

    return kernel


def _tail_terms(p, g):
    # Plain-JAX loss terms for the (< 128 element) unaligned tail.
    p = p.astype(jnp.float32)
    g = g.astype(jnp.float32)
    pos = g == 1.0
    keep = jnp.logical_or(pos, g < 1.0)
    w = jnp.where(pos, (1.0 - p) ** 2, (p * p) * (1.0 - g) ** 4)
    logx = jnp.log(jnp.where(pos, p, 1.0 - p))
    contrib = jnp.where(keep, logx * w, 0.0)
    return jnp.sum(contrib), jnp.sum(pos.astype(jnp.float32))


def focal_loss(pred, gt):
    """Pallas TPU implementation of FocalLoss.forward(pred, gt) -> scalar."""
    assert pred.shape == gt.shape
    total = math.prod(pred.shape)
    assert total > 0

    pred_flat = jnp.reshape(pred, (-1,))   # native dtype, free reshape
    gt_flat = jnp.reshape(gt, (-1,))

    rows = total // _LANES
    n_tail = total - rows * _LANES

    tail_loss = jnp.float32(0.0)
    tail_npos = jnp.float32(0.0)
    if n_tail:
        # Rare path (total % 128 != 0): fold the short tail in with plain JAX
        # instead of pad-concatenating both inputs through HBM.
        tail_loss, tail_npos = _tail_terms(pred_flat[rows * _LANES:],
                                           gt_flat[rows * _LANES:])
        pred_flat = pred_flat[:rows * _LANES]
        gt_flat = gt_flat[:rows * _LANES]

    if rows == 0:
        loss_sum, num_pos = tail_loss, tail_npos
    else:
        pred2d = jnp.reshape(pred_flat, (rows, _LANES))
        gt2d = jnp.reshape(gt_flat, (rows, _LANES))

        itemsize = max(jnp.dtype(pred2d.dtype).itemsize,
                       jnp.dtype(gt2d.dtype).itemsize)
        sub = max(_sublane_multiple(pred2d.dtype),
                  _sublane_multiple(gt2d.dtype))

        chunk_rows = min(_MAX_CHUNK_ROWS, _round_up(rows, sub))
        rows_budget = max(chunk_rows,
                          (_TILE_BYTES // (itemsize * _LANES))
                          // chunk_rows * chunk_rows)
        tile_rows = min(rows_budget, _round_up(rows, chunk_rows))

        n_tiles = -(-rows // tile_rows)
        n_split = min(_num_core_split(), n_tiles)
        tiles_per_core = -(-n_tiles // n_split)

        def in_map(c, i):
            # Clamp so a core-split overhang tile re-reads the last valid tile;
            # the kernel skips it entirely (rem_rows <= 0).
            t = jnp.minimum(c * tiles_per_core + i, n_tiles - 1)
            return (t, 0)

        part_shape = jax.ShapeDtypeStruct((n_split, 8, _LANES), jnp.float32)
        acc_spec = pl.BlockSpec((None, 8, _LANES), lambda c, i: (c, 0, 0))

        loss_part, npos_part = pl.pallas_call(
            _make_focal_kernel(rows, tile_rows, chunk_rows, tiles_per_core),
            out_shape=(part_shape, part_shape),
            grid_spec=pltpu.PrefetchScalarGridSpec(
                num_scalar_prefetch=0,
                grid=(n_split, tiles_per_core),
                in_specs=[
                    pl.BlockSpec((tile_rows, _LANES), in_map),
                    pl.BlockSpec((tile_rows, _LANES), in_map),
                ],
                out_specs=[acc_spec, acc_spec],
            ),
            compiler_params=pltpu.CompilerParams(
                dimension_semantics=("parallel", "arbitrary"),
                vmem_limit_bytes=32 * 1024 * 1024),
        )(pred2d, gt2d)

        loss_sum = jnp.sum(loss_part) + tail_loss
        num_pos = jnp.sum(npos_part) + tail_npos

    # Data-dependent `if num_pos == 0:` branch of the PyTorch forward.
    safe_num_pos = jnp.where(num_pos == 0, 1.0, num_pos)
    return jnp.where(num_pos == 0, -loss_sum, -loss_sum / safe_num_pos)


def _focal_loss_ref(pred, gt):
    # Pure-JAX reference mirroring the PyTorch module.
    pred = pred.astype(jnp.float32)
    gt = gt.astype(jnp.float32)
    pos_inds = (gt == 1.0).astype(jnp.float32)
    neg_inds = (gt < 1.0).astype(jnp.float32)
    neg_weights = (1.0 - gt) ** 4
    pos_loss = jnp.sum(jnp.log(pred) * (1.0 - pred) ** 2 * pos_inds)
    neg_loss = jnp.sum(jnp.log(1.0 - pred) * pred ** 2 * neg_weights * neg_inds)
    num_pos = jnp.sum(pos_inds)
    return jnp.where(num_pos == 0, -neg_loss,
                     -(pos_loss + neg_loss) / jnp.where(num_pos == 0, 1.0, num_pos))


if __name__ == "__main__":
    key = jax.random.PRNGKey(0)
    k_pred, k_gt, k_pos = jax.random.split(key, 3)

    B, C, H, W = 2, 4, 16, 16   # NCHW, like a heatmap head output
    # pred strictly inside (0, 1) (as after a sigmoid)
    pred = jax.nn.sigmoid(jax.random.normal(k_pred, (B, C, H, W), jnp.float32))
    # gt: Gaussian-splatted style heatmap values in [0, 1), with a few exact 1s
    gt = jax.random.uniform(k_gt, (B, C, H, W), jnp.float32, 0.0, 0.95)
    ones_mask = jax.random.uniform(k_pos, (B, C, H, W)) < 0.02
    gt = jnp.where(ones_mask, 1.0, gt)

    loss = focal_loss(pred, gt)
    jax.block_until_ready(loss)
    ref = _focal_loss_ref(pred, gt)
    assert jnp.allclose(loss, ref, rtol=1e-5, atol=1e-5), (loss, ref)

    # Also exercise the ragged path (total % 128 != 0): in-kernel row mask on
    # the last tile + plain-JAX tail, and the num_pos == 0 branch.
    k2p, k2g = jax.random.split(jax.random.PRNGKey(1))
    pred2 = jax.nn.sigmoid(jax.random.normal(k2p, (3, 5, 7, 11), jnp.float32))
    gt2 = jax.random.uniform(k2g, (3, 5, 7, 11), jnp.float32, 0.0, 0.999)
    loss2 = focal_loss(pred2, gt2)
    jax.block_until_ready(loss2)
    ref2 = _focal_loss_ref(pred2, gt2)
    assert jnp.allclose(loss2, ref2, rtol=1e-5, atol=1e-5), (loss2, ref2)

    print("KERNEL_OK")
</pallas_src>

<mosaic_0001>
module attributes {stable_mosaic.version = 11 : i64} {
  func.func @kernel(%arg0: i32, %arg1: i32, %arg2: memref<16x128xf32, #tpu.memory_space<vmem>>, %arg3: memref<16x128xf32, #tpu.memory_space<vmem>>, %arg4: memref<1x8x128xf32, #tpu.memory_space<vmem>>, %arg5: memref<1x8x128xf32, #tpu.memory_space<vmem>>) attributes {dimension_semantics = [#tpu.dimension_semantics<parallel>, #tpu.dimension_semantics<arbitrary>], iteration_bounds = array<i64: 1, 1>, scalar_prefetch = 0 : i64, scratch_operands = 0 : i64, tpu.core_type = #tpu.core_type<tc>, window_params = [{transform_indices = @transform_0, window_bounds = array<i64: 16, 128>}, {transform_indices = @transform_1, window_bounds = array<i64: 16, 128>}, {transform_indices = @transform_2, window_bounds = array<i64: 1, 8, 128>}, {transform_indices = @transform_3, window_bounds = array<i64: 1, 8, 128>}]} {
    %c0_i32 = arith.constant 0 : i32
    %0 = arith.cmpi eq, %arg1, %c0_i32 : i32
    %1 = arith.extui %0 : i1 to i32
    %c0_i32_0 = arith.constant 0 : i32
    %2 = arith.cmpi ne, %1, %c0_i32_0 : i32
    scf.if %2 {
      %cst = arith.constant 0.000000e+00 : f32
      %15 = vector.broadcast %cst : f32 to vector<8x128xf32>
      %c0 = arith.constant 0 : index
      %c0_7 = arith.constant 0 : index
      %c0_8 = arith.constant 0 : index
      %16 = vector.load %arg4[%c0, %c0_7, %c0_8] : memref<1x8x128xf32, #tpu.memory_space<vmem>>, vector<1x8x128xf32>
      %17 = vector.shape_cast %16 : vector<1x8x128xf32> to vector<8x128xf32>
      %18 = vector.shape_cast %15 : vector<8x128xf32> to vector<1x8x128xf32>
      tpu.vector_store %arg4[%c0, %c0_7, %c0_8], %18 {strides = array<i32>} : memref<1x8x128xf32, #tpu.memory_space<vmem>>, vector<1x8x128xf32>,
      %cst_9 = arith.constant 0.000000e+00 : f32
      %19 = vector.broadcast %cst_9 : f32 to vector<8x128xf32>
      %c0_10 = arith.constant 0 : index
      %c0_11 = arith.constant 0 : index
      %c0_12 = arith.constant 0 : index
      %20 = vector.load %arg5[%c0_10, %c0_11, %c0_12] : memref<1x8x128xf32, #tpu.memory_space<vmem>>, vector<1x8x128xf32>
      %21 = vector.shape_cast %20 : vector<1x8x128xf32> to vector<8x128xf32>
      %22 = vector.shape_cast %19 : vector<8x128xf32> to vector<1x8x128xf32>
      tpu.vector_store %arg5[%c0_10, %c0_11, %c0_12], %22 {strides = array<i32>} : memref<1x8x128xf32, #tpu.memory_space<vmem>>, vector<1x8x128xf32>,
    } else {
    }
    %c1_i32 = arith.constant 1 : i32
    %3 = arith.muli %arg0, %c1_i32 : i32
    %4 = arith.addi %3, %arg1 : i32
    %c16_i32 = arith.constant 16 : i32
    %5 = arith.muli %4, %c16_i32 : i32
    %c16_i32_1 = arith.constant 16 : i32
    %6 = arith.subi %c16_i32_1, %5 : i32
    %c16_i32_2 = arith.constant 16 : i32
    %7 = arith.cmpi sge, %6, %c16_i32_2 : i32
    %8 = arith.extui %7 : i1 to i32
    %c0_i32_3 = arith.constant 0 : i32
    %9 = arith.cmpi ne, %8, %c0_i32_3 : i32
    scf.if %9 {
      %c0 = arith.constant 0 : index
      %c0_7 = arith.constant 0 : index
      %15 = vector.load %arg2[%c0, %c0_7] : memref<16x128xf32, #tpu.memory_space<vmem>>, vector<16x128xf32>
      %c0_8 = arith.constant 0 : index
      %c0_9 = arith.constant 0 : index
      %16 = vector.load %arg3[%c0_8, %c0_9] : memref<16x128xf32, #tpu.memory_space<vmem>>, vector<16x128xf32>
      %cst = arith.constant 1.000000e+00 : f32
      %17 = vector.broadcast %cst : f32 to vector<16x128xf32>
      %18 = arith.cmpf oeq, %16, %17 : vector<16x128xf32>
      %cst_10 = arith.constant 1.000000e+00 : f32
      %19 = vector.broadcast %cst_10 : f32 to vector<16x128xf32>
      %20 = arith.subf %19, %15 : vector<16x128xf32>
      %cst_11 = arith.constant 1.000000e+00 : f32
      %21 = vector.broadcast %cst_11 : f32 to vector<16x128xf32>
      %22 = arith.subf %21, %16 : vector<16x128xf32>
      %23 = arith.mulf %22, %22 : vector<16x128xf32>
      %24 = arith.mulf %20, %20 : vector<16x128xf32>
      %25 = arith.mulf %15, %15 : vector<16x128xf32>
      %26 = arith.mulf %23, %23 : vector<16x128xf32>
      %27 = arith.mulf %25, %26 : vector<16x128xf32>
      %28 = arith.select %18, %24, %27 : vector<16x128xi1>, vector<16x128xf32>
      %29 = arith.select %18, %15, %20 : vector<16x128xi1>, vector<16x128xf32>
      %30 = math.log %29 : vector<16x128xf32>
      %cst_12 = arith.constant 1.000000e+00 : f32
      %31 = vector.broadcast %cst_12 : f32 to vector<16x128xf32>
      %32 = arith.cmpf olt, %16, %31 : vector<16x128xf32>
      %33 = arith.ori %18, %32 : vector<16x128xi1>
      %34 = arith.mulf %30, %28 : vector<16x128xf32>
      %cst_13 = arith.constant 0.000000e+00 : f32
      %35 = vector.broadcast %cst_13 : f32 to vector<16x128xf32>
      %36 = arith.select %33, %34, %35 : vector<16x128xi1>, vector<16x128xf32>
      %c0_14 = arith.constant 0 : index
      %c0_15 = arith.constant 0 : index
      %c0_16 = arith.constant 0 : index
      %37 = vector.load %arg4[%c0_14, %c0_15, %c0_16] : memref<1x8x128xf32, #tpu.memory_space<vmem>>, vector<1x8x128xf32>
      %38 = vector.shape_cast %37 : vector<1x8x128xf32> to vector<8x128xf32>
      %39 = vector.shape_cast %36 : vector<16x128xf32> to vector<2x8x128xf32>
      %cst_17 = arith.constant dense<0.000000e+00> : vector<8x128xf32>
      %40 = vector.multi_reduction <add>, %39, %cst_17 [0] : vector<2x8x128xf32> to vector<8x128xf32>
      %41 = arith.addf %38, %40 : vector<8x128xf32>
      %c0_18 = arith.constant 0 : index
      %c0_19 = arith.constant 0 : index
      %c0_20 = arith.constant 0 : index
      %42 = vector.load %arg4[%c0_18, %c0_19, %c0_20] : memref<1x8x128xf32, #tpu.memory_space<vmem>>, vector<1x8x128xf32>
      %43 = vector.shape_cast %42 : vector<1x8x128xf32> to vector<8x128xf32>
      %44 = vector.shape_cast %41 : vector<8x128xf32> to vector<1x8x128xf32>
      tpu.vector_store %arg4[%c0_18, %c0_19, %c0_20], %44 {strides = array<i32>} : memref<1x8x128xf32, #tpu.memory_space<vmem>>, vector<1x8x128xf32>,
      %c0_21 = arith.constant 0 : index
      %c0_22 = arith.constant 0 : index
      %c0_23 = arith.constant 0 : index
      %45 = vector.load %arg5[%c0_21, %c0_22, %c0_23] : memref<1x8x128xf32, #tpu.memory_space<vmem>>, vector<1x8x128xf32>
      %46 = vector.shape_cast %45 : vector<1x8x128xf32> to vector<8x128xf32>
      %47 = arith.extui %18 : vector<16x128xi1> to vector<16x128xi32>
      %48 = arith.sitofp %47 : vector<16x128xi32> to vector<16x128xf32>
      %49 = vector.shape_cast %48 : vector<16x128xf32> to vector<2x8x128xf32>
      %cst_24 = arith.constant dense<0.000000e+00> : vector<8x128xf32>
      %50 = vector.multi_reduction <add>, %49, %cst_24 [0] : vector<2x8x128xf32> to vector<8x128xf32>
      %51 = arith.addf %46, %50 : vector<8x128xf32>
      %c0_25 = arith.constant 0 : index
      %c0_26 = arith.constant 0 : index
      %c0_27 = arith.constant 0 : index
      %52 = vector.load %arg5[%c0_25, %c0_26, %c0_27] : memref<1x8x128xf32, #tpu.memory_space<vmem>>, vector<1x8x128xf32>
      %53 = vector.shape_cast %52 : vector<1x8x128xf32> to vector<8x128xf32>
      %54 = vector.shape_cast %51 : vector<8x128xf32> to vector<1x8x128xf32>
      tpu.vector_store %arg5[%c0_25, %c0_26, %c0_27], %54 {strides = array<i32>} : memref<1x8x128xf32, #tpu.memory_space<vmem>>, vector<1x8x128xf32>,
    } else {
    }
    %c0_i32_4 = arith.constant 0 : i32
    %10 = arith.cmpi sgt, %6, %c0_i32_4 : i32
    %c16_i32_5 = arith.constant 16 : i32
    %11 = arith.cmpi slt, %6, %c16_i32_5 : i32
    %12 = arith.andi %10, %11 : i1
    %13 = arith.extui %12 : i1 to i32
    %c0_i32_6 = arith.constant 0 : i32
    %14 = arith.cmpi ne, %13, %c0_i32_6 : i32
    scf.if %14 {
      %15 = tpu.iota {dimensions = array<i32: 0>} : vector<16x128xi32>
      %16 = vector.broadcast %6 : i32 to vector<16x128xi32>
      %17 = arith.cmpi slt, %15, %16 : vector<16x128xi32>
      %c0 = arith.constant 0 : index
      %c0_7 = arith.constant 0 : index
      %18 = vector.load %arg2[%c0, %c0_7] : memref<16x128xf32, #tpu.memory_space<vmem>>, vector<16x128xf32>
      %c0_8 = arith.constant 0 : index
      %c0_9 = arith.constant 0 : index
      %19 = vector.load %arg3[%c0_8, %c0_9] : memref<16x128xf32, #tpu.memory_space<vmem>>, vector<16x128xf32>
      %cst = arith.constant 1.000000e+00 : f32
      %20 = vector.broadcast %cst : f32 to vector<16x128xf32>
      %21 = arith.cmpf oeq, %19, %20 : vector<16x128xf32>
      %cst_10 = arith.constant 1.000000e+00 : f32
      %22 = vector.broadcast %cst_10 : f32 to vector<16x128xf32>
      %23 = arith.subf %22, %18 : vector<16x128xf32>
      %cst_11 = arith.constant 1.000000e+00 : f32
      %24 = vector.broadcast %cst_11 : f32 to vector<16x128xf32>
      %25 = arith.subf %24, %19 : vector<16x128xf32>
      %26 = arith.mulf %25, %25 : vector<16x128xf32>
      %27 = arith.mulf %23, %23 : vector<16x128xf32>
      %28 = arith.mulf %18, %18 : vector<16x128xf32>
      %29 = arith.mulf %26, %26 : vector<16x128xf32>
      %30 = arith.mulf %28, %29 : vector<16x128xf32>
      %31 = arith.select %21, %27, %30 : vector<16x128xi1>, vector<16x128xf32>
      %32 = arith.select %21, %18, %23 : vector<16x128xi1>, vector<16x128xf32>
      %33 = math.log %32 : vector<16x128xf32>
      %cst_12 = arith.constant 1.000000e+00 : f32
      %34 = vector.broadcast %cst_12 : f32 to vector<16x128xf32>
      %35 = arith.cmpf olt, %19, %34 : vector<16x128xf32>
      %36 = arith.ori %21, %35 : vector<16x128xi1>
      %37 = arith.andi %36, %17 : vector<16x128xi1>
      %38 = arith.andi %21, %17 : vector<16x128xi1>
      %39 = arith.mulf %33, %31 : vector<16x128xf32>
      %cst_13 = arith.constant 0.000000e+00 : f32
      %40 = vector.broadcast %cst_13 : f32 to vector<16x128xf32>
      %41 = arith.select %37, %39, %40 : vector<16x128xi1>, vector<16x128xf32>
      %c0_14 = arith.constant 0 : index
      %c0_15 = arith.constant 0 : index
      %c0_16 = arith.constant 0 : index
      %42 = vector.load %arg4[%c0_14, %c0_15, %c0_16] : memref<1x8x128xf32, #tpu.memory_space<vmem>>, vector<1x8x128xf32>
      %43 = vector.shape_cast %42 : vector<1x8x128xf32> to vector<8x128xf32>
      %44 = vector.shape_cast %41 : vector<16x128xf32> to vector<2x8x128xf32>
      %cst_17 = arith.constant dense<0.000000e+00> : vector<8x128xf32>
      %45 = vector.multi_reduction <add>, %44, %cst_17 [0] : vector<2x8x128xf32> to vector<8x128xf32>
      %46 = arith.addf %43, %45 : vector<8x128xf32>
      %c0_18 = arith.constant 0 : index
      %c0_19 = arith.constant 0 : index
      %c0_20 = arith.constant 0 : index
      %47 = vector.load %arg4[%c0_18, %c0_19, %c0_20] : memref<1x8x128xf32, #tpu.memory_space<vmem>>, vector<1x8x128xf32>
      %48 = vector.shape_cast %47 : vector<1x8x128xf32> to vector<8x128xf32>
      %49 = vector.shape_cast %46 : vector<8x128xf32> to vector<1x8x128xf32>
      tpu.vector_store %arg4[%c0_18, %c0_19, %c0_20], %49 {strides = array<i32>} : memref<1x8x128xf32, #tpu.memory_space<vmem>>, vector<1x8x128xf32>,
      %c0_21 = arith.constant 0 : index
      %c0_22 = arith.constant 0 : index
      %c0_23 = arith.constant 0 : index
      %50 = vector.load %arg5[%c0_21, %c0_22, %c0_23] : memref<1x8x128xf32, #tpu.memory_space<vmem>>, vector<1x8x128xf32>
      %51 = vector.shape_cast %50 : vector<1x8x128xf32> to vector<8x128xf32>
      %52 = arith.extui %38 : vector<16x128xi1> to vector<16x128xi32>
      %53 = arith.sitofp %52 : vector<16x128xi32> to vector<16x128xf32>
      %54 = vector.shape_cast %53 : vector<16x128xf32> to vector<2x8x128xf32>
      %cst_24 = arith.constant dense<0.000000e+00> : vector<8x128xf32>
      %55 = vector.multi_reduction <add>, %54, %cst_24 [0] : vector<2x8x128xf32> to vector<8x128xf32>
      %56 = arith.addf %51, %55 : vector<8x128xf32>
      %c0_25 = arith.constant 0 : index
      %c0_26 = arith.constant 0 : index
      %c0_27 = arith.constant 0 : index
      %57 = vector.load %arg5[%c0_25, %c0_26, %c0_27] : memref<1x8x128xf32, #tpu.memory_space<vmem>>, vector<1x8x128xf32>
      %58 = vector.shape_cast %57 : vector<1x8x128xf32> to vector<8x128xf32>
      %59 = vector.shape_cast %56 : vector<8x128xf32> to vector<1x8x128xf32>
      tpu.vector_store %arg5[%c0_25, %c0_26, %c0_27], %59 {strides = array<i32>} : memref<1x8x128xf32, #tpu.memory_space<vmem>>, vector<1x8x128xf32>,
    } else {
    }
    return
  }
  func.func @transform_0(%arg0: i32, %arg1: i32) -> (i32, i32) {
    %c1_i32 = arith.constant 1 : i32
    %0 = arith.muli %arg0, %c1_i32 : i32
    %1 = arith.addi %0, %arg1 : i32
    %c0_i32 = arith.constant 0 : i32
    %2 = arith.minsi %1, %c0_i32 : i32
    %c0_i32_0 = arith.constant 0 : i32
    %c0_i32_1 = arith.constant 0 : i32
    return %2, %c0_i32_0 : i32, i32
  }
  func.func @transform_1(%arg0: i32, %arg1: i32) -> (i32, i32) {
    %c1_i32 = arith.constant 1 : i32
    %0 = arith.muli %arg0, %c1_i32 : i32
    %1 = arith.addi %0, %arg1 : i32
    %c0_i32 = arith.constant 0 : i32
    %2 = arith.minsi %1, %c0_i32 : i32
    %c0_i32_0 = arith.constant 0 : i32
    %c0_i32_1 = arith.constant 0 : i32
    return %2, %c0_i32_0 : i32, i32
  }
  func.func @transform_2(%arg0: i32, %arg1: i32) -> (i32, i32, i32) {
    %c0_i32 = arith.constant 0 : i32
    %c0_i32_0 = arith.constant 0 : i32
    %c0_i32_1 = arith.constant 0 : i32
    return %arg0, %c0_i32, %c0_i32_0 : i32, i32, i32
  }
  func.func @transform_3(%arg0: i32, %arg1: i32) -> (i32, i32, i32) {
    %c0_i32 = arith.constant 0 : i32
    %c0_i32_0 = arith.constant 0 : i32
    %c0_i32_1 = arith.constant 0 : i32
    return %arg0, %c0_i32, %c0_i32_0 : i32, i32, i32
  }
}

</mosaic_0001>

<llo_original>
// kernel: tpu_custom_call.1
$region0: #{tpu_custom_call.1}
  #allocation0 [shape = 'u32[]', space=smem, size = 0x4, offset = 0x4, fixed_abs, tag = 'smem constant byte address 0x4 - core index']
  #allocation1 [shape = 'u32[144,128]{1,0:T(1,128)}', space=vmem, size = 0x12000, scoped, tag = 'internal scratch']
  %s0 = inlined_call_operand.hbm [shape: f32[16,128], index: 0, kind: input, shape index: {}]
  %s1 = inlined_call_operand.hbm [shape: f32[16,128], index: 1, kind: input, shape index: {}]
  %s2 = inlined_call_operand.hbm [shape: f32[1,8,128], index: 2, kind: output, shape index: {0}]
  %s3 = inlined_call_operand.hbm [shape: f32[1,8,128], index: 3, kind: output, shape index: {1}]
  %4 = xla_tuple %s2, %s3
  %s5 = sld [smem:[#allocation0]]
  $region46: #{tpu_custom_call.1} parent=0
    _
  %s7 = ssub.s32 1, %s5
  %s8 = scalar_select 0, %s7, %s5
  $region1: #{tpu_custom_call.1} parent=0
    #allocation2 [shape = 'u8[8192]{0}', space=vmem, size = 0x2000, scoped, tag = 'input window, operand 0, single buffered']
    #allocation3 [shape = 's32[1]{0}', space=sflag, size = 0x4, scoped, tag = 'scoped memory for tpu_custom_call.1']
    #allocation4 [shape = 's32[1]{0}', space=sflag, size = 0x4, scoped, tag = 'scoped memory for tpu_custom_call.1']
    #allocation5 [shape = 'u8[8192]{0}', space=vmem, size = 0x2000, scoped, tag = 'input window, operand 1, single buffered']
    #allocation6 [shape = 's32[1]{0}', space=sflag, size = 0x4, scoped, tag = 'scoped memory for tpu_custom_call.1']
    #allocation7 [shape = 'u8[4096]{0}', space=vmem, size = 0x1000, scoped, tag = 'output window, operand 0, single buffered']
    #allocation8 [shape = 'u8[4096]{0}', space=vmem, size = 0x1000, scoped, tag = 'output window, operand 1, single buffered']
    #allocation9 [shape = 's32[1]{0}', space=sflag, size = 0x4, scoped, tag = 'scoped memory for tpu_custom_call.1']
    %9 = vsyncpa [#allocation3], 0
    %10 = vsyncpa [#allocation6], 0
    %11 = vsyncpa [#allocation4], 0
    %12 = vsyncpa [#allocation9], 0
    // Predicated region
    $region2: #{tpu_custom_call.1} parent=1 // pred_check
      _
    $region3: #{tpu_custom_call.1} parent=1 // pred_check_branch
      %14 = sbr.rel (0) target = $region5
    $region4: #{tpu_custom_call.1} parent=1 // pred_region
      %s15 = sadd.s32 0, 0
      %p16 = scmp.lt.s32.totalorder %s15, 0
      %s17 = scalar_select %p16, %s15, 0
      %s18 = smul.u32 2, %s17
      %s20 = ssub.s32 256, 256
      %21 = vsyncadd [#allocation3], %s20
      %s22 = smul.addr %s18, 128
      %s23 = scalar_lea.hbm %s0, %s22
      %s24 = sshll.u32 [#allocation2], 4
      %s25 = int_to_ptr.vmem [resolvable:$true] %s24
      %30 = dma.hbm_to_vmem [thread:$0]  %s23, 256, %s25, [#allocation3], 128, 128, 8
    $region5: #{tpu_custom_call.1} parent=1 // pred_fallthru
      _
    // Predicated region
    $region6: #{tpu_custom_call.1} parent=1 // pred_check
      _
    $region7: #{tpu_custom_call.1} parent=1 // pred_check_branch
      %32 = sbr.rel (0) target = $region9
    $region8: #{tpu_custom_call.1} parent=1 // pred_region
      %s33 = sadd.s32 0, 0
      %p34 = scmp.lt.s32.totalorder %s33, 0
      %s35 = scalar_select %p34, %s33, 0
      %s36 = smul.u32 2, %s35
      %s38 = ssub.s32 256, 256
      %39 = vsyncadd [#allocation6], %s38
      %s40 = smul.addr %s36, 128
      %s41 = scalar_lea.hbm %s1, %s40
      %s42 = sshll.u32 [#allocation5], 4
      %s43 = int_to_ptr.vmem [resolvable:$true] %s42
      %48 = dma.hbm_to_vmem [thread:$0]  %s41, 256, %s43, [#allocation6], 128, 128, 8
    $region9: #{tpu_custom_call.1} parent=1 // pred_fallthru
      _
    // Predicated region
    $region10: #{tpu_custom_call.1} parent=1 // pred_check
      _
    $region11: #{tpu_custom_call.1} parent=1 // pred_check_branch
      %50 = sbr.rel (0) target = $region13
    $region12: #{tpu_custom_call.1} parent=1 // pred_region
      %51 = dma.done [#allocation3], 256
    $region13: #{tpu_custom_call.1} parent=1 // pred_fallthru
      _
    // Predicated region
    $region14: #{tpu_custom_call.1} parent=1 // pred_check
      _
    $region15: #{tpu_custom_call.1} parent=1 // pred_check_branch
      %53 = sbr.rel (0) target = $region17
    $region16: #{tpu_custom_call.1} parent=1 // pred_region
      %54 = dma.done [#allocation6], 256
    $region17: #{tpu_custom_call.1} parent=1 // pred_fallthru
      _
    %s55 = sadd.s32 0, 0
    %p56 = scmp.lt.s32.totalorder %s55, 0
    %s57 = scalar_select %p56, %s55, 0
    %s58 = smul.u32 2, %s57
    %s59 = sadd.s32 0, 0
    %p60 = scmp.lt.s32.totalorder %s59, 0
    %s61 = scalar_select %p60, %s59, 0
    %s62 = smul.u32 2, %s61
    %p63 = scmp.eq.s32.totalorder 0, 0
    // Predicated region
    $region18: #{tpu_custom_call.1} parent=1 // pred_check
      %p64 = pneg %p63
    $region19: #{tpu_custom_call.1} parent=1 // pred_check_branch
      %66 = sbr.rel (%p64) target = $region21
    $region20: #{tpu_custom_call.1} parent=1 // pred_region
      %67 = vst [vmem:[#allocation7] sm:$0xff] 0.0
      %68 = vst [vmem:[#allocation8] sm:$0xff] 0.0
    $region21: #{tpu_custom_call.1} parent=1 // pred_fallthru
      _
    %s69 = sadd.s32 0, 0
    %s70 = smul.u32 %s69, 16
    %s71 = ssub.s32 16, %s70
    %p72 = scmp.ge.s32.totalorder %s71, 16
    // Predicated region
    $region22: #{tpu_custom_call.1} parent=1 // pred_check
      %p73 = pneg %p72
    $region23: #{tpu_custom_call.1} parent=1 // pred_check_branch
      %75 = sbr.rel (%p73) target = $region25
    $region24: #{tpu_custom_call.1} parent=1 // pred_region
      %v76 = vld [vmem:[#allocation2] sm:$0xff]
      %v77 = vld [vmem:[#allocation2 + $0x8] sm:$0xff]
      %v78 = vld [vmem:[#allocation5] sm:$0xff]
      %v79 = vld [vmem:[#allocation5 + $0x8] sm:$0xff]
      %vm80 = vcmp.eq.f32.partialorder %v78, 1.0
      %vm81 = vcmp.eq.f32.partialorder %v79, 1.0
      %v82 = vsub.f32 1.0, %v76
      %v83 = vsub.f32 1.0, %v77
      %v84 = vsub.f32 1.0, %v78
      %v85 = vsub.f32 1.0, %v79
      %v86 = vmul.f32 %v84, %v84
      %v87 = vmul.f32 %v85, %v85
      %v88 = vmul.f32 %v82, %v82
      %v89 = vmul.f32 %v83, %v83
      %v90 = vmul.f32 %v76, %v76
      %v91 = vmul.f32 %v77, %v77
      %v92 = vmul.f32 %v86, %v86
      %v93 = vmul.f32 %v87, %v87
      %v94 = vmul.f32 %v90, %v92
      %v95 = vmul.f32 %v91, %v93
      %v96 = vsel %vm80, %v88, %v94
      %v97 = vsel %vm81, %v89, %v95
      %v98 = vsel %vm80, %v76, %v82
      %v99 = vsel %vm81, %v77, %v83
      %v100 = vlog2.pop %v98
      %v101 = vmul.f32 %v100, 0.6931472
      %v102 = vlog2.pop %v99
      %v103 = vmul.f32 %v102, 0.6931472
      %vm104 = vcmp.lt.f32.partialorder %v78, 1.0
      %vm105 = vcmp.lt.f32.partialorder %v79, 1.0
      %vm106 = vmor %vm80, %vm104
      %vm107 = vmor %vm81, %vm105
      %v108 = vmul.f32 %v101, %v96
      %v109 = vmul.f32 %v103, %v97
      %v110 = vsel %vm106, %v108, 0.0
      %v111 = vsel %vm107, %v109, 0.0
      %v112 = vld [vmem:[#allocation7] sm:$0xff]
      %v113 = vadd.f32 %v110, %v111
      %v114 = vadd.f32 %v112, %v113
      %115 = vst [vmem:[#allocation7] sm:$0xff] %v114
      %v116 = vld [vmem:[#allocation8] sm:$0xff]
      %v117 = vsel %vm80, 1, 0
      %v118 = vsel %vm81, 1, 0
      %v119 = vcvt.s32.f32 %v117
      %v120 = vcvt.s32.f32 %v118
      %v121 = vadd.f32 %v119, %v120
      %v122 = vadd.f32 %v116, %v121
      %123 = vst [vmem:[#allocation8] sm:$0xff] %v122
    $region25: #{tpu_custom_call.1} parent=1 // pred_fallthru
      _
    %p124 = scmp.gt.s32.totalorder %s71, 0
    %p125 = scmp.lt.s32.totalorder %s71, 16
    %p126 = pnand %p124, %p125
    %p127 = pneg %p126
    // Predicated region
    $region26: #{tpu_custom_call.1} parent=1 // pred_check
      _
    $region27: #{tpu_custom_call.1} parent=1 // pred_check_branch
      %129 = sbr.rel (%p126) target = $region29
    $region28: #{tpu_custom_call.1} parent=1 // pred_region
      %v130 = vlaneseq
      %v131 = vshrl.u32 %v130, 7
      %v132 = vadd.s32 %v131, 8
      %v133 = vstv %s71
      %vm134 = vcmp.lt.s32.totalorder %v131, %v133
      %vm135 = vcmp.lt.s32.totalorder %v132, %v133
      %v136 = vld [vmem:[#allocation2] sm:$0xff]
      %v137 = vld [vmem:[#allocation2 + $0x8] sm:$0xff]
      %v138 = vld [vmem:[#allocation5] sm:$0xff]
      %v139 = vld [vmem:[#allocation5 + $0x8] sm:$0xff]
      %vm140 = vcmp.eq.f32.partialorder %v138, 1.0
      %vm141 = vcmp.eq.f32.partialorder %v139, 1.0
      %v142 = vsub.f32 1.0, %v136
      %v143 = vsub.f32 1.0, %v137
      %v144 = vsub.f32 1.0, %v138
      %v145 = vsub.f32 1.0, %v139
      %v146 = vmul.f32 %v144, %v144
      %v147 = vmul.f32 %v145, %v145
      %v148 = vmul.f32 %v142, %v142
      %v149 = vmul.f32 %v143, %v143
      %v150 = vmul.f32 %v136, %v136
      %v151 = vmul.f32 %v137, %v137
      %v152 = vmul.f32 %v146, %v146
      %v153 = vmul.f32 %v147, %v147
      %v154 = vmul.f32 %v150, %v152
      %v155 = vmul.f32 %v151, %v153
      %v156 = vsel %vm140, %v148, %v154
      %v157 = vsel %vm141, %v149, %v155
      %v158 = vsel %vm140, %v136, %v142
      %v159 = vsel %vm141, %v137, %v143
      %v160 = vlog2.pop %v158
      %v161 = vmul.f32 %v160, 0.6931472
      %v162 = vlog2.pop %v159
      %v163 = vmul.f32 %v162, 0.6931472
      %vm164 = vcmp.lt.f32.partialorder %v138, 1.0
      %vm165 = vcmp.lt.f32.partialorder %v139, 1.0
      %vm166 = vmor %vm140, %vm164
      %vm167 = vmor %vm141, %vm165
      %vm168 = vmand %vm166, %vm134
      %vm169 = vmand %vm167, %vm135
      %vm170 = vmand %vm140, %vm134
      %vm171 = vmand %vm141, %vm135
      %v172 = vmul.f32 %v161, %v156
      %v173 = vmul.f32 %v163, %v157
      %v174 = vsel %vm168, %v172, 0.0
      %v175 = vsel %vm169, %v173, 0.0
      %v176 = vld [vmem:[#allocation7] sm:$0xff]
      %v177 = vadd.f32 %v174, %v175
      %v178 = vadd.f32 %v176, %v177
      %179 = vst [vmem:[#allocation7] sm:$0xff] %v178
      %v180 = vld [vmem:[#allocation8] sm:$0xff]
      %v181 = vsel %vm170, 1, 0
      %v182 = vsel %vm171, 1, 0
      %v183 = vcvt.s32.f32 %v181
      %v184 = vcvt.s32.f32 %v182
      %v185 = vadd.f32 %v183, %v184
      %v186 = vadd.f32 %v180, %v185
      %187 = vst [vmem:[#allocation8] sm:$0xff] %v186
    $region29: #{tpu_custom_call.1} parent=1 // pred_fallthru
      _
    // Predicated region
    $region30: #{tpu_custom_call.1} parent=1 // pred_check
      _
    $region31: #{tpu_custom_call.1} parent=1 // pred_check_branch
      %189 = sbr.rel (0) target = $region33
    $region32: #{tpu_custom_call.1} parent=1 // pred_region
      %s191 = ssub.s32 128, 128
      %192 = vsyncadd [#allocation4], %s191
      %s194 = sshll.u32 [#allocation7], 4
      %s195 = int_to_ptr.vmem [resolvable:$true] %s194
      %197 = dma.vmem_to_hbm [thread:$0]  %s195, 128, %s2, [#allocation4]
    $region33: #{tpu_custom_call.1} parent=1 // pred_fallthru
      _
    // Predicated region
    $region34: #{tpu_custom_call.1} parent=1 // pred_check
      _
    $region35: #{tpu_custom_call.1} parent=1 // pred_check_branch
      %199 = sbr.rel (0) target = $region37
    $region36: #{tpu_custom_call.1} parent=1 // pred_region
      %s201 = ssub.s32 128, 128
      %202 = vsyncadd [#allocation9], %s201
      %s204 = sshll.u32 [#allocation8], 4
      %s205 = int_to_ptr.vmem [resolvable:$true] %s204
      %207 = dma.vmem_to_hbm [thread:$0]  %s205, 128, %s3, [#allocation9]
    $region37: #{tpu_custom_call.1} parent=1 // pred_fallthru
      _
    // Predicated region
    $region38: #{tpu_custom_call.1} parent=1 // pred_check
      _
    $region39: #{tpu_custom_call.1} parent=1 // pred_check_branch
      %209 = sbr.rel (0) target = $region41
    $region40: #{tpu_custom_call.1} parent=1 // pred_region
      %210 = dma.done [#allocation4], 128
    $region41: #{tpu_custom_call.1} parent=1 // pred_fallthru
      _
    // Predicated region
    $region42: #{tpu_custom_call.1} parent=1 // pred_check
      _
    $region43: #{tpu_custom_call.1} parent=1 // pred_check_branch
      %212 = sbr.rel (0) target = $region45
    $region44: #{tpu_custom_call.1} parent=1 // pred_region
      %213 = dma.done [#allocation9], 128
    $region45: #{tpu_custom_call.1} parent=1 // pred_fallthru
      _
    %214 = vsyncpa [#allocation3], 1
    %215 = vsyncpa [#allocation6], 1
    %216 = vsyncpa [#allocation4], 1
    %217 = vsyncpa [#allocation9], 1

</llo_original>
